<compile_context>
chip_gen: v6e
topology: v6e:2x2x1
jax: 0.10.0
libtpu: 0.0.40
codegen_flags: <defaults>
</compile_context>

<pallas_src>
import numpy as np
import jax
import jax.numpy as jnp
from jax.experimental import pallas as pl
from jax.experimental.pallas import tpu as pltpu


# ---------------------------------------------------------------------------
# Host-side operator construction (glue): masks, k-NN, IDW weights.
# ---------------------------------------------------------------------------
def _norm_coord(coords, length):
    # mirrors norm_coord: [0, length] pixels -> [-1, 1]
    return (coords / length - 0.5) * 2.0


def build_idw_operators(shutter_len, k, p, h, w):
    """Dense IDW fill operators.

    Returns:
      m_ops  : (C, P, P) f32,  out_c[b, p] = sum_q coded[b, q] * m_ops[c, p, q]
      mt_all : (P, C*P) f32, fused/transposed so out[b, c*P+p] = (x @ mt_all)[b, c*P+p]
    """
    sl = np.asarray(shutter_len).reshape(h, w)
    uniq = np.unique(sl)                       # torch.unique is sorted too
    C = len(uniq)
    P = h * w

    rows, cols = np.meshgrid(np.arange(h), np.arange(w), indexing="ij")
    coords = np.stack([rows.ravel(), cols.ravel()], axis=1).astype(np.float64)
    ncoords = _norm_coord(coords, float(h))    # norm_coord uses mask.shape[1] == h

    m_ops = np.zeros((C, P, P), dtype=np.float32)
    for c, val in enumerate(uniq):
        mask = (sl == val).ravel()
        filled = np.nonzero(mask)[0]           # row-major, matches torch.nonzero
        unfilled = np.nonzero(~mask)[0]

        fc = ncoords[filled]                   # (F, 2)
        uc = ncoords[unfilled]                 # (U, 2)
        dist = np.sqrt(((uc[:, None, :] - fc[None, :, :]) ** 2).sum(-1))  # (U, F)

        idx = np.argsort(dist, axis=1, kind="stable")[:, :k]              # (U, k)
        dk = np.take_along_axis(dist, idx, axis=1)                        # (U, k)
        wgt = (1.0 / dk) ** p
        wn = (wgt / wgt.sum(axis=1, keepdims=True)).astype(np.float32)

        M = m_ops[c]
        # filled pixels pass through (mask == 1 there)
        M[filled, filled] = 1.0
        # unfilled pixels: inverse-distance-weighted sum of k nearest filled pixels
        for j in range(k):
            np.add.at(M, (unfilled, filled[idx[:, j]]), wn[:, j])

    # Fuse all channels into one lane-dense operator: mt_all[q, c*P + p] = M_c[p, q]
    mt_all = np.ascontiguousarray(np.transpose(m_ops, (2, 0, 1)).reshape(P, C * P))
    return m_ops, mt_all


# ---------------------------------------------------------------------------
# Tile / VMEM budgeting (per TPU generation).
# ---------------------------------------------------------------------------
MT_BUFS = 3          # 3-deep pipelining on the bandwidth-bound operator stream


def _round_up(x, m):
    return ((x + m - 1) // m) * m


def _vmem_budget_bytes():
    """~75% of physical per-core VMEM (v5e/v6e: 128 MiB -> ~96 MiB, v7x: 64 -> 48)."""
    cap = 64 * 1024 * 1024                      # conservative fallback (v7x per-TC)
    try:
        info = pltpu.get_tpu_info()
        cap = int(getattr(info, "vmem_capacity_bytes", cap)) or cap
    except Exception:
        pass
    return (cap * 3) // 4


def _choose_tiles(P, N, B_pad, budget):
    """Pick (tk, tn) multiples of 128 and padded (P_pad, N_pad) fitting the budget."""
    P128, N128 = _round_up(P, 128), _round_up(N, 128)
    tk_cap = 4096 if budget >= 72 * 1024 * 1024 else 2048     # v5e/v6e vs v7x
    tn_cap = 2048
    while True:
        tk = min(tk_cap, P128)
        tn = min(tn_cap, N128)
        # Keep >= 2 output tiles so the "parallel" axis spans both TCs (v7x megacore).
        if N128 // tn < 2 and N128 >= 256:
            tn = 128 * ((N128 // 128 + 1) // 2)
        P_pad, N_pad = _round_up(P, tk), _round_up(N, tn)
        need = (2 * B_pad * P_pad * 2          # resident coded image (bf16, 2 bufs)
                + MT_BUFS * tk * tn * 2        # operator tiles (bf16, MT_BUFS-deep)
                + 2 * B_pad * tn * 4)          # f32 output block (double-buffered)
        if need <= budget or (tk_cap <= 512 and tn_cap <= 512):
            assert tk % 128 == 0 and tn % 128 == 0
            assert P_pad % tk == 0 and N_pad % tn == 0
            return tk, tn, P_pad, N_pad, need
        if tk_cap >= tn_cap:
            tk_cap //= 2
        else:
            tn_cap //= 2


# ---------------------------------------------------------------------------
# Pallas kernel: fused multi-channel IDW fill as one tiled MXU matmul.
# ---------------------------------------------------------------------------
def _make_idw_kernel(tk):
    def kernel(x_ref, mt_ref, o_ref):
        # x_ref : (B_pad, P_pad)  bf16  whole coded image, VMEM-resident
        # mt_ref: (1, tk, tn)     bf16  one contiguous tile of the packed operator
        # o_ref : (B_pad, tn)     f32   accumulated in place across the K grid axis
        kk = pl.program_id(1)

        @pl.when(kk == 0)
        def _():
            o_ref[...] = jnp.zeros_like(o_ref)

        start = pl.multiple_of(kk * tk, 128)
        o_ref[...] += jnp.dot(x_ref[:, pl.ds(start, tk)], mt_ref[0],
                              preferred_element_type=jnp.float32)

    return kernel


def tree_multi_random_forward(coded, shutter_len, *, k=3, p=1, num_channels=4):
    b, _, h, w = coded.shape
    P = h * w

    _, mt_all_np = build_idw_operators(np.asarray(shutter_len), k, p, h, w)
    C = mt_all_np.shape[1] // P
    assert C == num_channels, "num_channels must equal number of unique shutter lengths"
    N = C * P

    budget = _vmem_budget_bytes()
    B_pad = _round_up(b, 16)                   # bf16 packs 16 sublanes per vreg
    tk, tn, P_pad, N_pad, vmem_need = _choose_tiles(P, N, B_pad, budget)
    Kt, Nt = P_pad // tk, N_pad // tn

    # Host-side: pad + tile-pack the fused operator so every (tk, tn) grid tile is a
    # single contiguous HBM region (long DMA bursts instead of tn*2-byte strided rows).
    mt_pad = np.zeros((P_pad, N_pad), dtype=np.float32)
    mt_pad[:P, :N] = mt_all_np
    mt_packed_np = np.ascontiguousarray(
        mt_pad.reshape(P_pad, Nt, tn).transpose(1, 0, 2))       # (Nt, P_pad, tn)
    mt = jnp.asarray(mt_packed_np, jnp.bfloat16)

    # Coded image: bf16, zero-padded to (B_pad, P_pad), fully VMEM-resident.
    # (Keep MT in f32 instead if closer parity with the f32 torch module is needed.)
    x_np = np.asarray(coded[:, 0, :, :], np.float32).reshape(b, P)
    x_pad = np.zeros((B_pad, P_pad), dtype=np.float32)
    x_pad[:b, :P] = x_np
    x = jnp.asarray(x_pad, jnp.bfloat16)

    vmem_limit = int(min(max(2 * vmem_need, 16 * 1024 * 1024), budget))

    cost = pl.CostEstimate(
        flops=2 * B_pad * P_pad * N_pad,
        transcendentals=0,
        bytes_accessed=x.size * 2 + mt.size * 2 + B_pad * N_pad * 4,
    )

    def build(mt_spec):
        return pl.pallas_call(
            _make_idw_kernel(tk),
            out_shape=jax.ShapeDtypeStruct((B_pad, N_pad), jnp.float32),
            grid_spec=pltpu.PrefetchScalarGridSpec(
                num_scalar_prefetch=0,
                grid=(Nt, Kt),
                in_specs=[
                    # whole coded image: constant block index -> single DMA, stays in VMEM
                    pl.BlockSpec((B_pad, P_pad), lambda n, kk: (0, 0)),
                    mt_spec,                                         # operator stream
                ],
                out_specs=pl.BlockSpec((B_pad, tn), lambda n, kk: (0, n)),
            ),
            compiler_params=pltpu.CompilerParams(
                dimension_semantics=("parallel", "arbitrary"),
                vmem_limit_bytes=vmem_limit),
            cost_estimate=cost,
        )

    mt_map = lambda n, kk: (n, kk, 0)
    try:
        # 3-deep buffering keeps the DMA queue non-empty on the HBM-bound MT stream.
        mt_spec = pl.BlockSpec((1, tk, tn), mt_map, pipeline_mode=pl.Buffered(MT_BUFS))
        out_flat = jax.block_until_ready(build(mt_spec)(x, mt))
    except Exception:
        # TODO(synk): fall back to default double-buffering if Buffered(3) is unsupported.
        mt_spec = pl.BlockSpec((1, tk, tn), mt_map)
        out_flat = jax.block_until_ready(build(mt_spec)(x, mt))

    # (B_pad, N_pad) -> (b, C, H, W): drop padding; reshape is a free row-major view.
    return out_flat[:b, :N].reshape(b, C, h, w)


# ---------------------------------------------------------------------------
# Quad shutter pattern (the module's `shutter_length`): 4 unique lengths.
# ---------------------------------------------------------------------------
def make_shutter_length(h, w):
    L = np.ones((h, w), dtype=np.float32)
    L[::4, 2::4] = 1
    L[1::4, 3::4] = 1
    L[::4, ::4] = 2
    L[1::4, 1::4] = 2
    L[2::4, 2::4] = 2
    L[3::4, 3::4] = 2
    L[2::4, ::4] = 3
    L[3::4, 1::4] = 3
    L[::2, 1::2] = 4
    L[1::2, ::2] = 4
    return jnp.asarray(L[None])  # (1, h, w)


if __name__ == "__main__":
    b, h, w = 2, 16, 16
    num_channels, k, p = 4, 3, 1

    key = jax.random.PRNGKey(0)
    coded = jax.random.uniform(key, (b, 1, h, w), dtype=jnp.float32)
    shutter_len = make_shutter_length(h, w)

    out = tree_multi_random_forward(coded, shutter_len,
                                    k=k, p=p, num_channels=num_channels)
    out = jax.block_until_ready(out)
    assert out.shape == (b, num_channels, h, w)
    assert out.dtype == jnp.float32

    # References of the same IDW-fill semantics.
    m_ops, mt_all = build_idw_operators(np.asarray(shutter_len), k, p, h, w)
    x_np = np.asarray(coded)[:, 0].reshape(b, h * w).astype(np.float32)

    # (a) Exact check against the bf16-stored operator/input the kernel consumes.
    x_q = np.asarray(jnp.asarray(x_np, jnp.bfloat16).astype(jnp.float32))
    mt_q = np.asarray(jnp.asarray(mt_all, jnp.bfloat16).astype(jnp.float32))
    ref_q = (x_q @ mt_q).reshape(b, num_channels, h, w)
    np.testing.assert_allclose(np.asarray(out), ref_q, rtol=1e-5, atol=1e-5)

    # (b) Full-precision IDW fill (module semantics); bf16 storage error is benign.
    ref_f32 = np.einsum("bq,cpq->bcp", x_np, m_ops).reshape(b, num_channels, h, w)
    np.testing.assert_allclose(np.asarray(out), ref_f32, rtol=2e-2, atol=2e-2)

    print("KERNEL_OK")
</pallas_src>

<mosaic_0001>
module attributes {stable_mosaic.version = 11 : i64} {
  func.func @kernel(%arg0: i32, %arg1: i32, %arg2: memref<16x256xbf16, #tpu.memory_space<vmem>>, %arg3: memref<1x256x512xbf16, #tpu.memory_space<vmem>>, %arg4: memref<16x512xf32, #tpu.memory_space<vmem>>) attributes {dimension_semantics = [#tpu.dimension_semantics<parallel>, #tpu.dimension_semantics<arbitrary>], iteration_bounds = array<i64: 2, 1>, scalar_prefetch = 0 : i64, scratch_operands = 0 : i64, tpu.core_type = #tpu.core_type<tc>, window_params = [{pipeline_mode = #tpu.pipeline_mode<synchronous>, transform_indices = @transform_0, window_bounds = array<i64: 16, 256>}, {transform_indices = @transform_1, window_bounds = array<i64: 1, 256, 512>}, {transform_indices = @transform_2, window_bounds = array<i64: 16, 512>}]} {
    %c0_i32 = arith.constant 0 : i32
    %0 = arith.cmpi eq, %arg1, %c0_i32 : i32
    %1 = arith.extui %0 : i1 to i32
    %c0_i32_0 = arith.constant 0 : i32
    %2 = arith.cmpi ne, %1, %c0_i32_0 : i32
    scf.if %2 {
      %cst_8 = arith.constant 0.000000e+00 : f32
      %13 = vector.broadcast %cst_8 : f32 to vector<16x512xf32>
      %c0_9 = arith.constant 0 : index
      %c0_10 = arith.constant 0 : index
      %14 = vector.load %arg4[%c0_9, %c0_10] : memref<16x512xf32, #tpu.memory_space<vmem>>, vector<16x512xf32>
      tpu.vector_store %arg4[%c0_9, %c0_10], %13 {strides = array<i32>} : memref<16x512xf32, #tpu.memory_space<vmem>>, vector<16x512xf32>,
    } else {
    }
    %c256_i32 = arith.constant 256 : i32
    %3 = arith.muli %arg1, %c256_i32 : i32
    %4 = tpu.assume_multiple %3, 128 : i32
    %c0 = arith.constant 0 : index
    %c0_1 = arith.constant 0 : index
    %5 = vector.load %arg4[%c0, %c0_1] : memref<16x512xf32, #tpu.memory_space<vmem>>, vector<16x512xf32>
    %c0_2 = arith.constant 0 : index
    %6 = arith.index_cast %4 : i32 to index
    %7 = vector.load %arg2[%c0_2, %6] : memref<16x256xbf16, #tpu.memory_space<vmem>>, vector<16x256xbf16>
    %c0_3 = arith.constant 0 : index
    %c0_4 = arith.constant 0 : index
    %c0_5 = arith.constant 0 : index
    %8 = vector.load %arg3[%c0_3, %c0_4, %c0_5] : memref<1x256x512xbf16, #tpu.memory_space<vmem>>, vector<1x256x512xbf16>
    %9 = vector.shape_cast %8 : vector<1x256x512xbf16> to vector<256x512xbf16>
    %cst = arith.constant dense<0.000000e+00> : vector<16x512xf32>
    %10 = tpu.matmul %7, %9, %cst {dimension_numbers = #tpu.dot_dimension_numbers<[1], [0], [0], [1], [0, 0, 1, 1], [], []>} : vector<16x256xbf16>, vector<256x512xbf16>, vector<16x512xf32> -> vector<16x512xf32>
    %11 = arith.addf %5, %10 : vector<16x512xf32>
    %c0_6 = arith.constant 0 : index
    %c0_7 = arith.constant 0 : index
    %12 = vector.load %arg4[%c0_6, %c0_7] : memref<16x512xf32, #tpu.memory_space<vmem>>, vector<16x512xf32>
    tpu.vector_store %arg4[%c0_6, %c0_7], %11 {strides = array<i32>} : memref<16x512xf32, #tpu.memory_space<vmem>>, vector<16x512xf32>,
    return
  }
  func.func @transform_0(%arg0: i32, %arg1: i32) -> (i32, i32) {
    %c0_i32 = arith.constant 0 : i32
    %c0_i32_0 = arith.constant 0 : i32
    %c0_i32_1 = arith.constant 0 : i32
    return %c0_i32, %c0_i32_0 : i32, i32
  }
  func.func @transform_1(%arg0: i32, %arg1: i32) -> (i32, i32, i32) {
    %c0_i32 = arith.constant 0 : i32
    %c0_i32_0 = arith.constant 0 : i32
    return %arg0, %arg1, %c0_i32 : i32, i32, i32
  }
  func.func @transform_2(%arg0: i32, %arg1: i32) -> (i32, i32) {
    %c0_i32 = arith.constant 0 : i32
    %c0_i32_0 = arith.constant 0 : i32
    return %c0_i32, %arg0 : i32, i32
  }
}

</mosaic_0001>

<llo_original>
// kernel: tpu_custom_call.1
$region0: #{tpu_custom_call.1}
  #allocation0 [shape = 'u32[]', space=smem, size = 0x4, offset = 0x4, fixed_abs, tag = 'smem constant byte address 0x4 - core index']
  #allocation1 [shape = 'u32[144,128]{1,0:T(1,128)}', space=vmem, size = 0x12000, scoped, tag = 'internal scratch']
  %s0 = inlined_call_operand.hbm [shape: bf16[16,256], index: 0, kind: input, shape index: {}]
  %s1 = inlined_call_operand.hbm [shape: bf16[2,256,512], index: 1, kind: input, shape index: {}]
  %s2 = inlined_call_operand.hbm [shape: f32[16,1024], index: 2, kind: output, shape index: {}]
  %s3 = sld [smem:[#allocation0]]
  $region53: #{tpu_custom_call.1} parent=0
    _
  %s5 = ssub.s32 1, %s3
  %s6 = scalar_select 0, %s5, %s3
  $region1: #{tpu_custom_call.1} parent=0
    #allocation2 [shape = 'u8[8192]{0}', space=vmem, size = 0x2000, scoped, tag = 'input window, operand 0, single buffered']
    #allocation3 [shape = 's32[2]{0}', space=sflag, size = 0x8, scoped, tag = 'scoped memory for tpu_custom_call.1']
    #allocation4 [shape = 's32[2]{0}', space=sflag, size = 0x8, scoped, tag = 'scoped memory for tpu_custom_call.1']
    #allocation5 [shape = 'u8[524288]{0}', space=vmem, size = 0x80000, scoped, tag = 'input window, operand 1']
    #allocation6 [shape = 's32[2]{0}', space=sflag, size = 0x8, scoped, tag = 'scoped memory for tpu_custom_call.1']
    #allocation7 [shape = 'u8[65536]{0}', space=vmem, size = 0x10000, scoped, tag = 'output window, operand 0']
    %7 = vsyncpa [#allocation3], 0
    %8 = vsyncpa [#allocation6], 0
    %s9 = scalar_lea.sflag [#allocation6], 1
    %10 = vsyncpa %s9, 0
    %11 = vsyncpa [#allocation4], 0
    %s12 = scalar_lea.sflag [#allocation4], 1
    %13 = vsyncpa %s12, 0
    loop: start=0, step=1, limit=4
    $region2: #{tpu_custom_call.1} parent=1 // loop_pre_header
      _
    $region3: #{tpu_custom_call.1} parent=1 // loop_header
      %s15 = sphi 0, %s19
      %p16 = scmp.ge.s32.totalorder %s15, 4
      %s22 = sphi 0, %s34
      %s23 = sphi 0, %s30
      %s24 = sphi 0, %s22
      %s25 = sphi 0, %s23
      %s26 = sphi 0, %s24
      %s27 = sphi 0, %s25
      %s35 = sphi 0, %s35
      %s37 = sphi 0, %s35
      %s38 = sphi 0, %s37
      %s52 = sphi 0, %s38
      %s60 = sphi 0, %s62
      %s63 = sphi 0, %s60
      %s64 = sphi 0, %s63
      %s80 = sphi 0, %s64
      %s86 = sphi 0, %s88
      %s89 = sphi 0, %s86
      %s90 = sphi 0, %s89
      %s106 = sphi 0, %s90
    $region4: #{tpu_custom_call.1} parent=1 // loop_header_branch
      %18 = sbr.rel (%p16) target = $region8
    $region5: #{tpu_custom_call.1} parent=1 // loop_body
      %s20 = ssub.s32 %s15, 1
      %s21 = ssub.s32 %s15, 2
      %s28 = sadd.s32 1, %s23
      %p29 = scmp.ge.s32.totalorder %s28, 1
      %s30 = scalar_select %p29, 0, %s28
      %s31 = sadd.s32 1, %s22
      %s32 = scalar_select %p29, %s31, %s22
      %p33 = scmp.ge.s32.totalorder %s32, 2
      %s34 = scalar_select %p33, 0, %s32
      %s36 = sadd.s32 %s35, 1
      %p39 = scmp.eq.s32.totalorder %s15, 1
      %p40 = scmp.ne.s32.totalorder %s35, %s37
      %p41 = scmp.eq.s32.totalorder %s15, 0
      %p42 = por %p40, %p41
      %p43 = scmp.ne.s32.totalorder %s35, %s37
      %p44 = scmp.eq.s32.totalorder %s20, 1
      %p45 = por %p43, %p44
      %p46 = scmp.ne.s32.totalorder %s37, %s38
      %p47 = scmp.eq.s32.totalorder %s20, 0
      %p48 = por %p46, %p47
      %p49 = scmp.ne.s32.totalorder %s37, %s38
      %p50 = scmp.eq.s32.totalorder %s21, 1
      %p51 = por %p49, %p50
      %p53 = scmp.ne.s32.totalorder %s38, %s52
      %p54 = scmp.eq.s32.totalorder %s21, 0
      %p55 = por %p53, %p54
      %s56 = ssub.s32 %s22, %s34
      %s57 = ssub.s32 %s23, %s30
      %s58 = sor.u32 %s56, %s57
      %p59 = scmp.eq.s32.totalorder %s58, 0
      %s61 = sadd.s32 %s60, 1
      %s62 = scalar_select %p59, %s60, %s61
      %p65 = pneg %p59
      %p66 = scmp.eq.s32.totalorder %s15, 1
      %p67 = por %p65, %p66
      %p68 = scmp.ne.s32.totalorder %s60, %s63
      %p69 = scmp.eq.s32.totalorder %s15, 0
      %p70 = por %p68, %p69
      %p71 = scmp.ne.s32.totalorder %s60, %s63
      %p72 = scmp.eq.s32.totalorder %s20, 1
      %p73 = por %p71, %p72
      %p74 = scmp.ne.s32.totalorder %s63, %s64
      %p75 = scmp.eq.s32.totalorder %s20, 0
      %p76 = por %p74, %p75
      %p77 = scmp.ne.s32.totalorder %s63, %s64
      %p78 = scmp.eq.s32.totalorder %s21, 1
      %p79 = por %p77, %p78
      %p81 = scmp.ne.s32.totalorder %s64, %s80
      %p82 = scmp.eq.s32.totalorder %s21, 0
      %p83 = por %p81, %p82
      %s84 = ssub.s32 %s22, %s34
      %p85 = scmp.eq.s32.totalorder %s84, 0
      %s87 = sadd.s32 %s86, 1
      %s88 = scalar_select %p85, %s86, %s87
      %p91 = pneg %p85
      %p92 = scmp.eq.s32.totalorder %s15, 1
      %p93 = por %p91, %p92
      %p94 = scmp.ne.s32.totalorder %s86, %s89
      %p95 = scmp.eq.s32.totalorder %s15, 0
      %p96 = por %p94, %p95
      %p97 = scmp.ne.s32.totalorder %s86, %s89
      %p98 = scmp.eq.s32.totalorder %s20, 1
      %p99 = por %p97, %p98
      %p100 = scmp.ne.s32.totalorder %s89, %s90
      %p101 = scmp.eq.s32.totalorder %s20, 0
      %p102 = por %p100, %p101
      %p103 = scmp.ne.s32.totalorder %s89, %s90
      %p104 = scmp.eq.s32.totalorder %s21, 1
      %p105 = por %p103, %p104
      %p107 = scmp.ne.s32.totalorder %s90, %s106
      %p108 = scmp.eq.s32.totalorder %s21, 0
      %p109 = por %p107, %p108
      %p110 = scmp.le.s32.totalorder 1, %s15
      %p111 = scmp.lt.s32.totalorder %s15, 3
      %p112 = pnand %p110, %p111
      %p113 = pneg %p112
      // Predicated region
      $region9: #{tpu_custom_call.1} parent=5 // pred_check
        _
      $region10: #{tpu_custom_call.1} parent=5 // pred_check_branch
        %115 = sbr.rel (%p112) target = $region12
      $region11: #{tpu_custom_call.1} parent=5 // pred_region
        %s116 = ssub.s32 %s15, 1
        // Predicated region
        $region13: #{tpu_custom_call.1} parent=11 // pred_check
          %p117 = pneg %p48
        $region14: #{tpu_custom_call.1} parent=11 // pred_check_branch
          %119 = sbr.rel (%p117) target = $region16
        $region15: #{tpu_custom_call.1} parent=11 // pred_region
          %s121 = ssub.s32 256, 256
          %122 = vsyncadd [#allocation3], %s121
          %s123 = sshll.u32 [#allocation2], 4
          %s124 = int_to_ptr.vmem [resolvable:$true] %s123
          %129 = dma.hbm_to_vmem [thread:$0]  %s0, 256, %s124, [#allocation3], 128, 128, 8
        $region16: #{tpu_custom_call.1} parent=11 // pred_fallthru
          _
      $region12: #{tpu_custom_call.1} parent=5 // pred_fallthru
        _
      %p130 = scmp.lt.s32.totalorder %s15, 2
      // Predicated region
      $region17: #{tpu_custom_call.1} parent=5 // pred_check
        %p131 = pneg %p130
      $region18: #{tpu_custom_call.1} parent=5 // pred_check_branch
        %133 = sbr.rel (%p131) target = $region20
      $region19: #{tpu_custom_call.1} parent=5 // pred_region
        // Predicated region
        $region21: #{tpu_custom_call.1} parent=19 // pred_check
          %p134 = pneg %p70
        $region22: #{tpu_custom_call.1} parent=19 // pred_check_branch
          %136 = sbr.rel (%p134) target = $region24
        $region23: #{tpu_custom_call.1} parent=19 // pred_region
          %s137 = sand.u32 %s60, 1
          %s138 = scalar_lea.sflag [#allocation6], %s137
          %s139 = sand.u32 %s60, 1
          %s140 = smul.addr %s139, 512
          %s141 = scalar_lea.vmem [#allocation5], %s140
          %s142 = smul.u32 32, %s23
          %s144 = ssub.s32 8192, 8192
          %145 = vsyncadd %s138, %s144
          %s146 = smul.addr %s142, 4
          %s147 = smul.addr %s22, 128
          %s148 = sadd.s32 %s146, %s147
          %s149 = smul.addr %s148, 64
          %s150 = scalar_lea.hbm %s1, %s149
          %s151 = sshll.u32 %s141, 4
          %s152 = int_to_ptr.vmem [resolvable:$true] %s151
          %157 = dma.hbm_to_vmem [thread:$0]  %s150, 8192, %s152, %s138, 256, 256, 16
        $region24: #{tpu_custom_call.1} parent=19 // pred_fallthru
          _
      $region20: #{tpu_custom_call.1} parent=5 // pred_fallthru
        _
      %p158 = scmp.le.s32.totalorder 1, %s15
      %p159 = scmp.lt.s32.totalorder %s15, 3
      %p160 = pnand %p158, %p159
      %p161 = pneg %p160
      // Predicated region
      $region25: #{tpu_custom_call.1} parent=5 // pred_check
        _
      $region26: #{tpu_custom_call.1} parent=5 // pred_check_branch
        %163 = sbr.rel (%p160) target = $region28
      $region27: #{tpu_custom_call.1} parent=5 // pred_region
        %s164 = ssub.s32 %s15, 1
        // Predicated region
        $region29: #{tpu_custom_call.1} parent=27 // pred_check
          %p165 = pneg %p48
        $region30: #{tpu_custom_call.1} parent=27 // pred_check_branch
          %167 = sbr.rel (%p165) target = $region32
        $region31: #{tpu_custom_call.1} parent=27 // pred_region
          %168 = dma.done [#allocation3], 256
        $region32: #{tpu_custom_call.1} parent=27 // pred_fallthru
          _
        %s169 = sand.u32 %s63, 1
        %s170 = scalar_lea.sflag [#allocation6], %s169
        %s171 = sand.u32 %s63, 1
        %s172 = smul.addr %s171, 512
        %s173 = scalar_lea.vmem [#allocation5], %s172
        // Predicated region
        $region33: #{tpu_custom_call.1} parent=27 // pred_check
          %p174 = pneg %p76
        $region34: #{tpu_custom_call.1} parent=27 // pred_check_branch
          %176 = sbr.rel (%p174) target = $region36
        $region35: #{tpu_custom_call.1} parent=27 // pred_region
          %177 = dma.done %s170, 8192
        $region36: #{tpu_custom_call.1} parent=27 // pred_fallthru
          _
        %p178 = pneg %p48
        %p179 = pneg %p45
        %s180 = sand.u32 %s63, 1
        %s181 = scalar_lea.sflag [#allocation6], %s180
        %s182 = sand.u32 %s63, 1
        %s183 = smul.addr %s182, 512
        %s184 = scalar_lea.vmem [#allocation5], %s183
        %p185 = pneg %p76
        %p186 = pneg %p73
        %p187 = pneg %p102
        %p188 = pneg %p99
        %s189 = sand.u32 %s89, 1
        %s190 = scalar_lea.sflag [#allocation4], %s189
        %s191 = sand.u32 %s89, 1
        %s192 = smul.addr %s191, 64
        %s193 = scalar_lea.vmem [#allocation7], %s192
        %s194 = smul.u32 32, %s25
        %s195 = smul.u32 4, %s24
        %p196 = scmp.eq.s32.totalorder %s25, 0
        // Predicated region
        $region37: #{tpu_custom_call.1} parent=27 // pred_check
          %p197 = pneg %p196
        $region38: #{tpu_custom_call.1} parent=27 // pred_check_branch
          %199 = sbr.rel (%p197) target = $region40
        $region39: #{tpu_custom_call.1} parent=27 // pred_region
          %200 = vst [vmem:[%s193] sm:$0xff] 0.0
          %201 = vst [vmem:[%s193 + $0x8] sm:$0xff] 0.0
          %202 = vst [vmem:[%s193 + $0x10] sm:$0xff] 0.0
          %203 = vst [vmem:[%s193 + $0x18] sm:$0xff] 0.0
          %204 = vst [vmem:[%s193 + $0x20] sm:$0xff] 0.0
          %205 = vst [vmem:[%s193 + $0x28] sm:$0xff] 0.0
          %206 = vst [vmem:[%s193 + $0x30] sm:$0xff] 0.0
          %207 = vst [vmem:[%s193 + $0x38] sm:$0xff] 0.0
        $region40: #{tpu_custom_call.1} parent=27 // pred_fallthru
          _
        %s208 = smul.u32 %s25, 256
        %v209 = vld [vmem:[%s193] sm:$0xff]
        %v210 = vld [vmem:[%s193 + $0x8] sm:$0xff]
        %v211 = vld [vmem:[%s193 + $0x10] sm:$0xff]
        %v212 = vld [vmem:[%s193 + $0x18] sm:$0xff]
        %v213 = vld [vmem:[%s193 + $0x20] sm:$0xff]
        %v214 = vld [vmem:[%s193 + $0x28] sm:$0xff]
        %v215 = vld [vmem:[%s193 + $0x30] sm:$0xff]
        %v216 = vld [vmem:[%s193 + $0x38] sm:$0xff]
        %s217 = sshra.s32 %s208, 7
        %s218 = sand.u32 %s208, 127
        %s219 = smul.addr %s217, 4
        %s220 = scalar_lea.vmem [#allocation2], %s219
        %v221 = vld [vmem:[%s220] sm:$0xff]
        %v222 = vld [vmem:[%s220 + $0x8] sm:$0xff]
        %v223 = vld [vmem:[%s173] sm:$0xff]
        %v224 = vld [vmem:[%s173 + $0x8] sm:$0xff]
        %v225 = vld [vmem:[%s173 + $0x10] sm:$0xff]
        %v226 = vld [vmem:[%s173 + $0x18] sm:$0xff]
        %v227 = vld [vmem:[%s173 + $0x20] sm:$0xff]
        %v228 = vld [vmem:[%s173 + $0x28] sm:$0xff]
        %v229 = vld [vmem:[%s173 + $0x30] sm:$0xff]
        %v230 = vld [vmem:[%s173 + $0x38] sm:$0xff]
        %v231 = vld [vmem:[%s173 + $0x40] sm:$0xff]
        %v232 = vld [vmem:[%s173 + $0x48] sm:$0xff]
        %v233 = vld [vmem:[%s173 + $0x50] sm:$0xff]
        %v234 = vld [vmem:[%s173 + $0x58] sm:$0xff]
        %v235 = vld [vmem:[%s173 + $0x60] sm:$0xff]
        %v236 = vld [vmem:[%s173 + $0x68] sm:$0xff]
        %v237 = vld [vmem:[%s173 + $0x70] sm:$0xff]
        %v238 = vld [vmem:[%s173 + $0x78] sm:$0xff]
        %v239 = vld [vmem:[%s173 + $0x80] sm:$0xff]
        %v240 = vld [vmem:[%s173 + $0x88] sm:$0xff]
        %v241 = vld [vmem:[%s173 + $0x90] sm:$0xff]
        %v242 = vld [vmem:[%s173 + $0x98] sm:$0xff]
        %v243 = vld [vmem:[%s173 + $0xa0] sm:$0xff]
        %v244 = vld [vmem:[%s173 + $0xa8] sm:$0xff]
        %v245 = vld [vmem:[%s173 + $0xb0] sm:$0xff]
        %v246 = vld [vmem:[%s173 + $0xb8] sm:$0xff]
        %v247 = vld [vmem:[%s173 + $0xc0] sm:$0xff]
        %v248 = vld [vmem:[%s173 + $0xc8] sm:$0xff]
        %v249 = vld [vmem:[%s173 + $0xd0] sm:$0xff]
        %v250 = vld [vmem:[%s173 + $0xd8] sm:$0xff]
        %v251 = vld [vmem:[%s173 + $0xe0] sm:$0xff]
        %v252 = vld [vmem:[%s173 + $0xe8] sm:$0xff]
        %v253 = vld [vmem:[%s173 + $0xf0] sm:$0xff]
        %v254 = vld [vmem:[%s173 + $0xf8] sm:$0xff]
        %v255 = vld [vmem:[%s173 + $0x100] sm:$0xff]
        %v256 = vld [vmem:[%s173 + $0x108] sm:$0xff]
        %v257 = vld [vmem:[%s173 + $0x110] sm:$0xff]
        %v258 = vld [vmem:[%s173 + $0x118] sm:$0xff]
        %v259 = vld [vmem:[%s173 + $0x120] sm:$0xff]
        %v260 = vld [vmem:[%s173 + $0x128] sm:$0xff]
        %v261 = vld [vmem:[%s173 + $0x130] sm:$0xff]
        %v262 = vld [vmem:[%s173 + $0x138] sm:$0xff]
        %v263 = vld [vmem:[%s173 + $0x140] sm:$0xff]
        %v264 = vld [vmem:[%s173 + $0x148] sm:$0xff]
        %v265 = vld [vmem:[%s173 + $0x150] sm:$0xff]
        %v266 = vld [vmem:[%s173 + $0x158] sm:$0xff]
        %v267 = vld [vmem:[%s173 + $0x160] sm:$0xff]
        %v268 = vld [vmem:[%s173 + $0x168] sm:$0xff]
        %v269 = vld [vmem:[%s173 + $0x170] sm:$0xff]
        %v270 = vld [vmem:[%s173 + $0x178] sm:$0xff]
        %v271 = vld [vmem:[%s173 + $0x180] sm:$0xff]
        %v272 = vld [vmem:[%s173 + $0x188] sm:$0xff]
        %v273 = vld [vmem:[%s173 + $0x190] sm:$0xff]
        %v274 = vld [vmem:[%s173 + $0x198] sm:$0xff]
        %v275 = vld [vmem:[%s173 + $0x1a0] sm:$0xff]
        %v276 = vld [vmem:[%s173 + $0x1a8] sm:$0xff]
        %v277 = vld [vmem:[%s173 + $0x1b0] sm:$0xff]
        %v278 = vld [vmem:[%s173 + $0x1b8] sm:$0xff]
        %v279 = vld [vmem:[%s173 + $0x1c0] sm:$0xff]
        %v280 = vld [vmem:[%s173 + $0x1c8] sm:$0xff]
        %v281 = vld [vmem:[%s173 + $0x1d0] sm:$0xff]
        %v282 = vld [vmem:[%s173 + $0x1d8] sm:$0xff]
        %v283 = vld [vmem:[%s173 + $0x1e0] sm:$0xff]
        %v284 = vld [vmem:[%s173 + $0x1e8] sm:$0xff]
        %v285 = vld [vmem:[%s173 + $0x1f0] sm:$0xff]
        %v286 = vld [vmem:[%s173 + $0x1f8] sm:$0xff]
        %v289 = vunpack.c.l.b16 %v221
        %v290 = vunpack.c.h.b16 %v221
        %v291 = vunpack.c.l.b16 %v222
        %v292 = vunpack.c.h.b16 %v222
        %v293 = vpack.c.b16 %v291, %v289
        %v294 = vpack.c.b16 %v292, %v290
        %v361 = vunpack.c.l.b16 %v223
        %v362 = vunpack.c.h.b16 %v223
        %v363 = vunpack.c.l.b16 %v224
        %v364 = vunpack.c.h.b16 %v224
        %v365 = vunpack.c.l.b16 %v225
        %v366 = vunpack.c.h.b16 %v225
        %v367 = vunpack.c.l.b16 %v226
        %v368 = vunpack.c.h.b16 %v226
        %v369 = vunpack.c.l.b16 %v227
        %v370 = vunpack.c.h.b16 %v227
        %v371 = vunpack.c.l.b16 %v228
        %v372 = vunpack.c.h.b16 %v228
        %v373 = vunpack.c.l.b16 %v229
        %v374 = vunpack.c.h.b16 %v229
        %v375 = vunpack.c.l.b16 %v230
        %v376 = vunpack.c.h.b16 %v230
        %v377 = vunpack.c.l.b16 %v231
        %v378 = vunpack.c.h.b16 %v231
        %v379 = vunpack.c.l.b16 %v232
        %v380 = vunpack.c.h.b16 %v232
        %v381 = vunpack.c.l.b16 %v233
        %v382 = vunpack.c.h.b16 %v233
        %v383 = vunpack.c.l.b16 %v234
        %v384 = vunpack.c.h.b16 %v234
        %v385 = vunpack.c.l.b16 %v235
        %v386 = vunpack.c.h.b16 %v235
        %v387 = vunpack.c.l.b16 %v236
        %v388 = vunpack.c.h.b16 %v236
        %v389 = vunpack.c.l.b16 %v237
        %v390 = vunpack.c.h.b16 %v237
        %v391 = vunpack.c.l.b16 %v238
        %v392 = vunpack.c.h.b16 %v238
        %v393 = vunpack.c.l.b16 %v239
        %v394 = vunpack.c.h.b16 %v239
        %v395 = vunpack.c.l.b16 %v240
        %v396 = vunpack.c.h.b16 %v240
        %v397 = vunpack.c.l.b16 %v241
        %v398 = vunpack.c.h.b16 %v241
        %v399 = vunpack.c.l.b16 %v242
        %v400 = vunpack.c.h.b16 %v242
        %v401 = vunpack.c.l.b16 %v243
        %v402 = vunpack.c.h.b16 %v243
        %v403 = vunpack.c.l.b16 %v244
        %v404 = vunpack.c.h.b16 %v244
        %v405 = vunpack.c.l.b16 %v245
        %v406 = vunpack.c.h.b16 %v245
        %v407 = vunpack.c.l.b16 %v246
        %v408 = vunpack.c.h.b16 %v246
        %v409 = vunpack.c.l.b16 %v247
        %v410 = vunpack.c.h.b16 %v247
        %v411 = vunpack.c.l.b16 %v248
        %v412 = vunpack.c.h.b16 %v248
        %v413 = vunpack.c.l.b16 %v249
        %v414 = vunpack.c.h.b16 %v249
        %v415 = vunpack.c.l.b16 %v250
        %v416 = vunpack.c.h.b16 %v250
        %v417 = vunpack.c.l.b16 %v251
        %v418 = vunpack.c.h.b16 %v251
        %v419 = vunpack.c.l.b16 %v252
        %v420 = vunpack.c.h.b16 %v252
        %v421 = vunpack.c.l.b16 %v253
        %v422 = vunpack.c.h.b16 %v253
        %v423 = vunpack.c.l.b16 %v254
        %v424 = vunpack.c.h.b16 %v254
        %v425 = vunpack.c.l.b16 %v255
        %v426 = vunpack.c.h.b16 %v255
        %v427 = vunpack.c.l.b16 %v256
        %v428 = vunpack.c.h.b16 %v256
        %v429 = vunpack.c.l.b16 %v257
        %v430 = vunpack.c.h.b16 %v257
        %v431 = vunpack.c.l.b16 %v258
        %v432 = vunpack.c.h.b16 %v258
        %v433 = vunpack.c.l.b16 %v259
        %v434 = vunpack.c.h.b16 %v259
        %v435 = vunpack.c.l.b16 %v260
        %v436 = vunpack.c.h.b16 %v260
        %v437 = vunpack.c.l.b16 %v261
        %v438 = vunpack.c.h.b16 %v261
        %v439 = vunpack.c.l.b16 %v262
        %v440 = vunpack.c.h.b16 %v262
        %v441 = vunpack.c.l.b16 %v263
        %v442 = vunpack.c.h.b16 %v263
        %v443 = vunpack.c.l.b16 %v264
        %v444 = vunpack.c.h.b16 %v264
        %v445 = vunpack.c.l.b16 %v265
        %v446 = vunpack.c.h.b16 %v265
        %v447 = vunpack.c.l.b16 %v266
        %v448 = vunpack.c.h.b16 %v266
        %v449 = vunpack.c.l.b16 %v267
        %v450 = vunpack.c.h.b16 %v267
        %v451 = vunpack.c.l.b16 %v268
        %v452 = vunpack.c.h.b16 %v268
        %v453 = vunpack.c.l.b16 %v269
        %v454 = vunpack.c.h.b16 %v269
        %v455 = vunpack.c.l.b16 %v270
        %v456 = vunpack.c.h.b16 %v270
        %v457 = vunpack.c.l.b16 %v271
        %v458 = vunpack.c.h.b16 %v271
        %v459 = vunpack.c.l.b16 %v272
        %v460 = vunpack.c.h.b16 %v272
        %v461 = vunpack.c.l.b16 %v273
        %v462 = vunpack.c.h.b16 %v273
        %v463 = vunpack.c.l.b16 %v274
        %v464 = vunpack.c.h.b16 %v274
        %v465 = vunpack.c.l.b16 %v275
        %v466 = vunpack.c.h.b16 %v275
        %v467 = vunpack.c.l.b16 %v276
        %v468 = vunpack.c.h.b16 %v276
        %v469 = vunpack.c.l.b16 %v277
        %v470 = vunpack.c.h.b16 %v277
        %v471 = vunpack.c.l.b16 %v278
        %v472 = vunpack.c.h.b16 %v278
        %v473 = vunpack.c.l.b16 %v279
        %v474 = vunpack.c.h.b16 %v279
        %v475 = vunpack.c.l.b16 %v280
        %v476 = vunpack.c.h.b16 %v280
        %v477 = vunpack.c.l.b16 %v281
        %v478 = vunpack.c.h.b16 %v281
        %v479 = vunpack.c.l.b16 %v282
        %v480 = vunpack.c.h.b16 %v282
        %v481 = vunpack.c.l.b16 %v283
        %v482 = vunpack.c.h.b16 %v283
        %v483 = vunpack.c.l.b16 %v284
        %v484 = vunpack.c.h.b16 %v284
        %v485 = vunpack.c.l.b16 %v285
        %v486 = vunpack.c.h.b16 %v285
        %v487 = vunpack.c.l.b16 %v286
        %v488 = vunpack.c.h.b16 %v286
        %v489 = vpack.c.b16 %v365, %v361
        %v490 = vpack.c.b16 %v366, %v362
        %v491 = vpack.c.b16 %v367, %v363
        %v492 = vpack.c.b16 %v368, %v364
        %v493 = vpack.c.b16 %v373, %v369
        %v494 = vpack.c.b16 %v374, %v370
        %v495 = vpack.c.b16 %v375, %v371
        %v496 = vpack.c.b16 %v376, %v372
        %v497 = vpack.c.b16 %v381, %v377
        %v498 = vpack.c.b16 %v382, %v378
        %v499 = vpack.c.b16 %v383, %v379
        %v500 = vpack.c.b16 %v384, %v380
        %v501 = vpack.c.b16 %v389, %v385
        %v502 = vpack.c.b16 %v390, %v386
        %v503 = vpack.c.b16 %v391, %v387
        %v504 = vpack.c.b16 %v392, %v388
        %v505 = vpack.c.b16 %v397, %v393
        %v506 = vpack.c.b16 %v398, %v394
        %v507 = vpack.c.b16 %v399, %v395
        %v508 = vpack.c.b16 %v400, %v396
        %v509 = vpack.c.b16 %v405, %v401
        %v510 = vpack.c.b16 %v406, %v402
        %v511 = vpack.c.b16 %v407, %v403
        %v512 = vpack.c.b16 %v408, %v404
        %v513 = vpack.c.b16 %v413, %v409
        %v514 = vpack.c.b16 %v414, %v410
        %v515 = vpack.c.b16 %v415, %v411
        %v516 = vpack.c.b16 %v416, %v412
        %v517 = vpack.c.b16 %v421, %v417
        %v518 = vpack.c.b16 %v422, %v418
        %v519 = vpack.c.b16 %v423, %v419
        %v520 = vpack.c.b16 %v424, %v420
        %v521 = vpack.c.b16 %v429, %v425
        %v522 = vpack.c.b16 %v430, %v426
        %v523 = vpack.c.b16 %v431, %v427
        %v524 = vpack.c.b16 %v432, %v428
        %v525 = vpack.c.b16 %v437, %v433
        %v526 = vpack.c.b16 %v438, %v434
        %v527 = vpack.c.b16 %v439, %v435
        %v528 = vpack.c.b16 %v440, %v436
        %v529 = vpack.c.b16 %v445, %v441
        %v530 = vpack.c.b16 %v446, %v442
        %v531 = vpack.c.b16 %v447, %v443
        %v532 = vpack.c.b16 %v448, %v444
        %v533 = vpack.c.b16 %v453, %v449
        %v534 = vpack.c.b16 %v454, %v450
        %v535 = vpack.c.b16 %v455, %v451
        %v536 = vpack.c.b16 %v456, %v452
        %v537 = vpack.c.b16 %v461, %v457
        %v538 = vpack.c.b16 %v462, %v458
        %v539 = vpack.c.b16 %v463, %v459
        %v540 = vpack.c.b16 %v464, %v460
        %v541 = vpack.c.b16 %v469, %v465
        %v542 = vpack.c.b16 %v470, %v466
        %v543 = vpack.c.b16 %v471, %v467
        %v544 = vpack.c.b16 %v472, %v468
        %v545 = vpack.c.b16 %v477, %v473
        %v546 = vpack.c.b16 %v478, %v474
        %v547 = vpack.c.b16 %v479, %v475
        %v548 = vpack.c.b16 %v480, %v476
        %v549 = vpack.c.b16 %v485, %v481
        %v550 = vpack.c.b16 %v486, %v482
        %v551 = vpack.c.b16 %v487, %v483
        %v552 = vpack.c.b16 %v488, %v484
        %617 = vmatprep.subr.bf16.mxu0 %v518
        %618 = vmatpush1.bf16.msra.mxu0 %v517
        %619 = vmatprep.subr.bf16.mxu0 %v514
        %620 = vmatpush1.bf16.msra.mxu0 %v513
        %621 = vmatprep.subr.bf16.mxu0 %v510
        %622 = vmatpush1.bf16.msra.mxu0 %v509
        %623 = vmatprep.subr.bf16.mxu0 %v506
        %624 = vmatpush1.bf16.msra.mxu0 %v505
        %625 = vmatprep.subr.bf16.mxu0 %v502
        %626 = vmatpush1.bf16.msra.mxu0 %v501
        %627 = vmatprep.subr.bf16.mxu0 %v498
        %628 = vmatpush1.bf16.msra.mxu0 %v497
        %629 = vmatprep.subr.bf16.mxu0 %v494
        %630 = vmatpush1.bf16.msra.mxu0 %v493
        %631 = vmatprep.subr.bf16.mxu0 %v490
        %632 = vmatpush1.bf16.msra.mxu0 %v489
        %633 = vmatprep.subr.bf16.mxu0 %v550
        %634 = vmatpush2.bf16.msra.mxu0 %v549
        %635 = vmatprep.subr.bf16.mxu0 %v546
        %636 = vmatpush2.bf16.msra.mxu0 %v545
        %637 = vmatprep.subr.bf16.mxu0 %v542
        %638 = vmatpush2.bf16.msra.mxu0 %v541
        %639 = vmatprep.subr.bf16.mxu0 %v538
        %640 = vmatpush2.bf16.msra.mxu0 %v537
        %641 = vmatprep.subr.bf16.mxu0 %v534
        %642 = vmatpush2.bf16.msra.mxu0 %v533
        %643 = vmatprep.subr.bf16.mxu0 %v530
        %644 = vmatpush2.bf16.msra.mxu0 %v529
        %645 = vmatprep.subr.bf16.mxu0 %v526
        %646 = vmatpush2.bf16.msra.mxu0 %v525
        %647 = vmatprep.subr.bf16.mxu0 %v522
        %648 = vmatpush2.bf16.msra.mxu0 %v521
        %649 = vmatprep.mubr.bf16.mxu0 %v294
        %650 = vmatmul.mubr.bf16.gmra.mxu0 %v293
        %v651 = vpop.f32.mrf.mxu0
        %v652 = vadd.f32 0.0, %v651
        %v653 = vpop.f32.mrf.mxu0
        %v654 = vadd.f32 0.0, %v653
        %v655 = vpop.f32.mrf.mxu0
        %v656 = vadd.f32 0.0, %v655
        %v657 = vpop.f32.mrf.mxu0
        %v658 = vadd.f32 0.0, %v657
        %659 = vdwg.mxu0
        %660 = vmatprep.subr.bf16.mxu0 %v520
        %661 = vmatpush1.bf16.msra.mxu0 %v519
        %662 = vmatprep.subr.bf16.mxu0 %v516
        %663 = vmatpush1.bf16.msra.mxu0 %v515
        %664 = vmatprep.subr.bf16.mxu0 %v512
        %665 = vmatpush1.bf16.msra.mxu0 %v511
        %666 = vmatprep.subr.bf16.mxu0 %v508
        %667 = vmatpush1.bf16.msra.mxu0 %v507
        %668 = vmatprep.subr.bf16.mxu0 %v504
        %669 = vmatpush1.bf16.msra.mxu0 %v503
        %670 = vmatprep.subr.bf16.mxu0 %v500
        %671 = vmatpush1.bf16.msra.mxu0 %v499
        %672 = vmatprep.subr.bf16.mxu0 %v496
        %673 = vmatpush1.bf16.msra.mxu0 %v495
        %674 = vmatprep.subr.bf16.mxu0 %v492
        %675 = vmatpush1.bf16.msra.mxu0 %v491
        %676 = vmatprep.subr.bf16.mxu0 %v552
        %677 = vmatpush2.bf16.msra.mxu0 %v551
        %678 = vmatprep.subr.bf16.mxu0 %v548
        %679 = vmatpush2.bf16.msra.mxu0 %v547
        %680 = vmatprep.subr.bf16.mxu0 %v544
        %681 = vmatpush2.bf16.msra.mxu0 %v543
        %682 = vmatprep.subr.bf16.mxu0 %v540
        %683 = vmatpush2.bf16.msra.mxu0 %v539
        %684 = vmatprep.subr.bf16.mxu0 %v536
        %685 = vmatpush2.bf16.msra.mxu0 %v535
        %686 = vmatprep.subr.bf16.mxu0 %v532
        %687 = vmatpush2.bf16.msra.mxu0 %v531
        %688 = vmatprep.subr.bf16.mxu0 %v528
        %689 = vmatpush2.bf16.msra.mxu0 %v527
        %690 = vmatprep.subr.bf16.mxu0 %v524
        %691 = vmatpush2.bf16.msra.mxu0 %v523
        %692 = vmatprep.mubr.bf16.mxu0 %v294
        %693 = vmatmul.mubr.bf16.gmra.mxu0 %v293
        %v694 = vpop.f32.mrf.mxu0
        %v695 = vadd.f32 0.0, %v694
        %v696 = vpop.f32.mrf.mxu0
        %v697 = vadd.f32 0.0, %v696
        %v698 = vpop.f32.mrf.mxu0
        %v699 = vadd.f32 0.0, %v698
        %v700 = vpop.f32.mrf.mxu0
        %v701 = vadd.f32 0.0, %v700
        %702 = vdwg.mxu0
        %v703 = vadd.f32 %v209, %v652
        %v704 = vadd.f32 %v210, %v654
        %v705 = vadd.f32 %v211, %v695
        %v706 = vadd.f32 %v212, %v697
        %v707 = vadd.f32 %v213, %v656
        %v708 = vadd.f32 %v214, %v658
        %v709 = vadd.f32 %v215, %v699
        %v710 = vadd.f32 %v216, %v701
        %711 = vst [vmem:[%s193] sm:$0xff] %v703
        %712 = vst [vmem:[%s193 + $0x8] sm:$0xff] %v704
        %713 = vst [vmem:[%s193 + $0x10] sm:$0xff] %v705
        %714 = vst [vmem:[%s193 + $0x18] sm:$0xff] %v706
        %715 = vst [vmem:[%s193 + $0x20] sm:$0xff] %v707
        %716 = vst [vmem:[%s193 + $0x28] sm:$0xff] %v708
        %717 = vst [vmem:[%s193 + $0x30] sm:$0xff] %v709
        %718 = vst [vmem:[%s193 + $0x38] sm:$0xff] %v710
        %s719 = sand.u32 %s89, 1
        %s720 = scalar_lea.sflag [#allocation4], %s719
        %s721 = sand.u32 %s89, 1
        %s722 = smul.addr %s721, 64
        %s723 = scalar_lea.vmem [#allocation7], %s722
        // Predicated region
        $region41: #{tpu_custom_call.1} parent=27 // pred_check
          %p724 = pneg %p99
        $region42: #{tpu_custom_call.1} parent=27 // pred_check_branch
          %726 = sbr.rel (%p724) target = $region44
        $region43: #{tpu_custom_call.1} parent=27 // pred_region
          %s727 = smul.u32 4, %s24
          %s729 = ssub.s32 1024, 1024
          %730 = vsyncadd %s720, %s729
          %s731 = smul.addr %s727, 128
          %s732 = scalar_lea.hbm %s2, %s731
          %s733 = sshll.u32 %s723, 4
          %s734 = int_to_ptr.vmem [resolvable:$true] %s733
          %739 = dma.vmem_to_hbm [thread:$0]  %s734, 1024, %s732, %s720, 512, 1024, 32
        $region44: #{tpu_custom_call.1} parent=27 // pred_fallthru
          _
      $region28: #{tpu_custom_call.1} parent=5 // pred_fallthru
        _
      %p740 = scmp.le.s32.totalorder 2, %s15
      // Predicated region
      $region45: #{tpu_custom_call.1} parent=5 // pred_check
        %p741 = pneg %p740
      $region46: #{tpu_custom_call.1} parent=5 // pred_check_branch
        %743 = sbr.rel (%p741) target = $region48
      $region47: #{tpu_custom_call.1} parent=5 // pred_region
        %s744 = ssub.s32 %s15, 2
        // Predicated region
        $region49: #{tpu_custom_call.1} parent=47 // pred_check
          %p745 = pneg %p105
        $region50: #{tpu_custom_call.1} parent=47 // pred_check_branch
          %747 = sbr.rel (%p745) target = $region52
        $region51: #{tpu_custom_call.1} parent=47 // pred_region
          %s748 = sand.u32 %s90, 1
          %s749 = scalar_lea.sflag [#allocation4], %s748
          %s750 = sand.u32 %s90, 1
          %s751 = smul.addr %s750, 64
          %s752 = scalar_lea.vmem [#allocation7], %s751
          %753 = dma.done %s749, 1024
        $region52: #{tpu_custom_call.1} parent=47 // pred_fallthru
          _
      $region48: #{tpu_custom_call.1} parent=5 // pred_fallthru
        _
    $region6: #{tpu_custom_call.1} parent=1 // loop_footer
      %s19 = sadd.s32 1, %s15
    $region7: #{tpu_custom_call.1} parent=1 // loop_footer_branch
      %14 = sbr.rel target = $region3
    $region8: #{tpu_custom_call.1} parent=1 // loop_exit
      _
    %754 = vsyncpa [#allocation3], 1
    %s755 = scalar_lea.sflag [#allocation3], 1
    %756 = vsyncpa %s755, 1
    %757 = vsyncpa [#allocation6], 1
    %s758 = scalar_lea.sflag [#allocation6], 1
    %759 = vsyncpa %s758, 1
    %760 = vsyncpa [#allocation4], 1
    %s761 = scalar_lea.sflag [#allocation4], 1
    %762 = vsyncpa %s761, 1

</llo_original>
